<compile_context>
chip_gen: v5e
topology: v5e:2x2
jax: 0.10.0
libtpu: 0.0.40
codegen_flags: <defaults>
</compile_context>

<pallas_src>
import functools
import math

import jax
import jax.numpy as jnp
from jax import lax
from jax.experimental import pallas as pl
from jax.experimental.pallas import tpu as pltpu


def _round_up(a, b):
    return -(-a // b) * b


def _arc_margin_kernel(params_ref, x_ref, w_ref, ixn_ref, iwn_ref,
                       out_ref, cos_ref, acc_ref, *, easy_margin):
    """Grid = (M//tm, N//tn, K//tk). K (axis 2) is the reduction axis."""
    k = pl.program_id(2)

    @pl.when(k == 0)
    def _():
        acc_ref[...] = jnp.zeros_like(acc_ref)

    # (tm, tk) . (tn, tk) contracted over K -> (tm, tn), f32 MXU accumulation.
    # Weight is consumed in its native (out_features, in_features) layout.
    acc_ref[...] += lax.dot_general(
        x_ref[...], w_ref[...],
        dimension_numbers=(((1,), (1,)), ((), ())),
        preferred_element_type=jnp.float32)

    @pl.when(k == pl.num_programs(2) - 1)
    def _():
        cos_m = params_ref[0]
        sin_m = params_ref[1]
        th = params_ref[2]
        mm = params_ref[3]
        s = params_ref[4]

        # Fused normalization: cosine = (x @ w.T) * |x|^-1 * |w|^-1
        cosine = acc_ref[...] * ixn_ref[...] * iwn_ref[...]
        cos_ref[...] = cosine.astype(cos_ref.dtype)

        sine = jnp.sqrt(jnp.clip(1.0 - cosine * cosine, 0.0, 1.0))
        phi = cosine * cos_m - sine * sin_m
        if easy_margin:
            phi = jnp.where(cosine > 0.0, phi, cosine)
        else:
            phi = jnp.where(cosine > th, phi, cosine - mm)
        out_ref[...] = (phi * s).astype(out_ref.dtype)


def arc_margin_cosine_and_logits(x, weight, cos_m, sin_m, th, mm, s, *,
                                 easy_margin=False, tm=256, tn=512, tk=512):
    """Returns (margin_logits, cosine), each (B, out_features).

    x:      (B, in_features)            float32
    weight: (out_features, in_features) float32
    cos_m/sin_m/th/mm/s: f32 scalars (runtime), passed to the kernel via SMEM.

    Tile guidance: tm mult of 8, tn/tk mult of 128.
      v6e (128 MiB VMEM): tm=256, tn=512, tk=512-1024
      v7x (64 MiB VMEM):  tm=256, tn=256-512, tk=256-512
      v5e (16 MiB scoped default): tm=128, tn=128-256, tk=512
    Defaults below stay < ~8 MiB of double-buffered VMEM, safe on all three.
    """
    B, K = x.shape
    N, K2 = weight.shape
    assert K == K2, "in_features mismatch"

    # Shrink tiles for small problems; keep lane/sublane alignment.
    tm = min(tm, _round_up(B, 8))
    tn = min(tn, _round_up(N, 128))
    tk = min(tk, _round_up(K, 128))

    M_pad = _round_up(B, tm)
    N_pad = _round_up(N, tn)
    K_pad = _round_up(K, tk)

    # Tiny inverse-L2-norm vectors (F.normalize eps=1e-12 semantics). Padded
    # rows get inv-norm 0, so padded cosines are exactly 0.
    inv_xn = 1.0 / jnp.maximum(jnp.linalg.norm(x, axis=1, keepdims=True), 1e-12)
    inv_wn = 1.0 / jnp.maximum(jnp.linalg.norm(weight, axis=1, keepdims=True), 1e-12)

    xp = jnp.pad(x, ((0, M_pad - B), (0, K_pad - K)))
    wp = jnp.pad(weight, ((0, N_pad - N), (0, K_pad - K)))
    ixn = jnp.pad(inv_xn.astype(jnp.float32), ((0, M_pad - B), (0, 0)))            # (M_pad, 1)
    iwn = jnp.pad(inv_wn.astype(jnp.float32).T, ((0, 0), (0, N_pad - N)))          # (1, N_pad)

    params = jnp.stack([
        jnp.asarray(cos_m, jnp.float32),
        jnp.asarray(sin_m, jnp.float32),
        jnp.asarray(th, jnp.float32),
        jnp.asarray(mm, jnp.float32),
        jnp.asarray(s, jnp.float32),
    ])

    grid = (M_pad // tm, N_pad // tn, K_pad // tk)

    cost = pl.CostEstimate(
        flops=2 * M_pad * N_pad * K_pad,
        transcendentals=M_pad * N_pad,          # the sqrt in the epilogue
        bytes_accessed=4 * (M_pad * K_pad + N_pad * K_pad + 2 * M_pad * N_pad),
    )

    kernel = functools.partial(_arc_margin_kernel, easy_margin=easy_margin)

    out, cosine = pl.pallas_call(
        kernel,
        out_shape=(jax.ShapeDtypeStruct((M_pad, N_pad), x.dtype),
                   jax.ShapeDtypeStruct((M_pad, N_pad), x.dtype)),
        grid=grid,
        in_specs=[
            pl.BlockSpec(memory_space=pltpu.MemorySpace.SMEM),        # margin scalars
            pl.BlockSpec((tm, tk), lambda i, j, k: (i, k)),           # x tile
            pl.BlockSpec((tn, tk), lambda i, j, k: (j, k)),           # weight tile (no .T in HBM)
            pl.BlockSpec((tm, 1), lambda i, j, k: (i, 0)),            # 1/|x| per row
            pl.BlockSpec((1, tn), lambda i, j, k: (0, j)),            # 1/|w| per class
        ],
        out_specs=(pl.BlockSpec((tm, tn), lambda i, j, k: (i, j)),    # margin logits
                   pl.BlockSpec((tm, tn), lambda i, j, k: (i, j))),   # cosine
        scratch_shapes=[pltpu.VMEM((tm, tn), jnp.float32)],           # f32 accumulator
        compiler_params=pltpu.CompilerParams(
            dimension_semantics=("parallel", "parallel", "arbitrary"),
            vmem_limit_bytes=32 * 1024 * 1024,
        ),
        cost_estimate=cost,
    )(params, xp, wp, ixn, iwn)

    return out[:B, :N], cosine[:B, :N]


def arc_margin_product_forward(x, weight, m, *, s=30.0, easy_margin=False,
                               training=True, randomization=False, std=0.1,
                               rng_key=None):
    """Mirrors ArcMarginProduct.forward. (learned_mg, epoch, label are unused
    by the original forward and therefore omitted here.)"""
    m = jnp.asarray(m, jnp.float32)
    if training and randomization:
        # torch.normal(mean=m, std=self.std); deterministic unless a key is given.
        assert rng_key is not None, "randomization=True requires rng_key"
        m = m + std * jax.random.normal(rng_key, (), dtype=jnp.float32)

    m_eff = 1.0 - m
    cos_m = jnp.cos(m_eff)
    sin_m = jnp.sin(m_eff)
    th = jnp.cos(jnp.pi - m_eff)
    mm = jnp.sin(jnp.pi - m_eff) * m_eff

    out, cosine = arc_margin_cosine_and_logits(
        x, weight, cos_m, sin_m, th, mm, jnp.asarray(s, jnp.float32),
        easy_margin=easy_margin)

    if not training:
        return (None, cosine)
    return (out, cosine)


def xavier_uniform(key, out_features, in_features, dtype=jnp.float32):
    # Matches torch.nn.init.xavier_uniform_ (gain=1).
    bound = math.sqrt(6.0 / (in_features + out_features))
    return jax.random.uniform(
        key, (out_features, in_features), dtype=dtype, minval=-bound, maxval=bound)


if __name__ == "__main__":
    in_features = 32
    out_features = 16
    batch = 8
    s = 30.0
    m = 0.5

    key = jax.random.PRNGKey(0)
    k_w, k_x = jax.random.split(key)

    weight = xavier_uniform(k_w, out_features, in_features)
    x = jax.random.normal(k_x, (batch, in_features), dtype=jnp.float32)

    # Training mode: (margin_logits, cosine)
    train_out, train_cos = arc_margin_product_forward(
        x, weight, m, s=s, easy_margin=False, training=True)
    jax.block_until_ready(train_out)
    jax.block_until_ready(train_cos)

    # Eval mode: (None, cosine)
    none_out, eval_cos = arc_margin_product_forward(
        x, weight, m, s=s, easy_margin=False, training=False)
    assert none_out is None
    jax.block_until_ready(eval_cos)

    # Plain-JAX reference (mirrors the PyTorch forward).
    def ref_forward(x, w, m, s, easy_margin=False):
        xn = x / jnp.maximum(jnp.linalg.norm(x, axis=1, keepdims=True), 1e-12)
        wn = w / jnp.maximum(jnp.linalg.norm(w, axis=1, keepdims=True), 1e-12)
        cos = xn @ wn.T
        me = 1.0 - m
        cm, sm = jnp.cos(me), jnp.sin(me)
        th_ = jnp.cos(jnp.pi - me)
        mm_ = jnp.sin(jnp.pi - me) * me
        sine = jnp.sqrt(jnp.clip(1.0 - cos * cos, 0.0, 1.0))
        phi = cos * cm - sine * sm
        if easy_margin:
            phi = jnp.where(cos > 0.0, phi, cos)
        else:
            phi = jnp.where(cos > th_, phi, cos - mm_)
        return phi * s, cos

    ref_out, ref_cos = ref_forward(x, weight, jnp.float32(m), jnp.float32(s))

    assert train_out.shape == (batch, out_features)
    assert train_cos.shape == (batch, out_features)
    assert jnp.allclose(train_cos, ref_cos, atol=1e-5, rtol=1e-5)
    assert jnp.allclose(eval_cos, ref_cos, atol=1e-5, rtol=1e-5)
    assert jnp.allclose(train_out, ref_out, atol=1e-4, rtol=1e-5)

    print("KERNEL_OK")
</pallas_src>

<mosaic_0001>
module attributes {stable_mosaic.version = 11 : i64} {
  func.func @_arc_margin_kernel(%arg0: i32, %arg1: i32, %arg2: i32, %arg3: memref<5xf32, #tpu.memory_space<smem>>, %arg4: memref<8x128xf32, #tpu.memory_space<vmem>>, %arg5: memref<128x128xf32, #tpu.memory_space<vmem>>, %arg6: memref<8x1xf32, #tpu.memory_space<vmem>>, %arg7: memref<1x128xf32, #tpu.memory_space<vmem>>, %arg8: memref<8x128xf32, #tpu.memory_space<vmem>>, %arg9: memref<8x128xf32, #tpu.memory_space<vmem>>, %arg10: memref<8x128xf32, #tpu.memory_space<vmem>>) attributes {dimension_semantics = [#tpu.dimension_semantics<parallel>, #tpu.dimension_semantics<parallel>, #tpu.dimension_semantics<arbitrary>], iteration_bounds = array<i64: 1, 1, 1>, scalar_prefetch = 0 : i64, scratch_operands = 1 : i64, tpu.core_type = #tpu.core_type<tc>, window_params = [{transform_indices = @transform_0, window_bounds = array<i64: 5>}, {transform_indices = @transform_1, window_bounds = array<i64: 8, 128>}, {transform_indices = @transform_2, window_bounds = array<i64: 128, 128>}, {transform_indices = @transform_3, window_bounds = array<i64: 8, 1>}, {transform_indices = @transform_4, window_bounds = array<i64: 1, 128>}, {transform_indices = @transform_5, window_bounds = array<i64: 8, 128>}, {transform_indices = @transform_6, window_bounds = array<i64: 8, 128>}]} {
    %c0_i32 = arith.constant 0 : i32
    %0 = arith.cmpi eq, %arg2, %c0_i32 : i32
    %1 = arith.extui %0 : i1 to i32
    %c0_i32_0 = arith.constant 0 : i32
    %2 = arith.cmpi ne, %1, %c0_i32_0 : i32
    scf.if %2 {
      %cst_10 = arith.constant 0.000000e+00 : f32
      %12 = vector.broadcast %cst_10 : f32 to vector<8x128xf32>
      %c0_11 = arith.constant 0 : index
      %c0_12 = arith.constant 0 : index
      %13 = vector.load %arg10[%c0_11, %c0_12] : memref<8x128xf32, #tpu.memory_space<vmem>>, vector<8x128xf32>
      tpu.vector_store %arg10[%c0_11, %c0_12], %12 {strides = array<i32>} : memref<8x128xf32, #tpu.memory_space<vmem>>, vector<8x128xf32>,
    } else {
    }
    %c0 = arith.constant 0 : index
    %c0_1 = arith.constant 0 : index
    %3 = vector.load %arg10[%c0, %c0_1] : memref<8x128xf32, #tpu.memory_space<vmem>>, vector<8x128xf32>
    %c0_2 = arith.constant 0 : index
    %c0_3 = arith.constant 0 : index
    %4 = vector.load %arg4[%c0_2, %c0_3] : memref<8x128xf32, #tpu.memory_space<vmem>>, vector<8x128xf32>
    %c0_4 = arith.constant 0 : index
    %c0_5 = arith.constant 0 : index
    %5 = vector.load %arg5[%c0_4, %c0_5] : memref<128x128xf32, #tpu.memory_space<vmem>>, vector<128x128xf32>
    %cst = arith.constant dense<0.000000e+00> : vector<8x128xf32>
    %6 = tpu.matmul %4, %5, %cst {dimension_numbers = #tpu.dot_dimension_numbers<[1], [1], [0], [0], [0, 0, 1, 0], [], []>} : vector<8x128xf32>, vector<128x128xf32>, vector<8x128xf32> -> vector<8x128xf32>
    %7 = arith.addf %3, %6 : vector<8x128xf32>
    %c0_6 = arith.constant 0 : index
    %c0_7 = arith.constant 0 : index
    %8 = vector.load %arg10[%c0_6, %c0_7] : memref<8x128xf32, #tpu.memory_space<vmem>>, vector<8x128xf32>
    tpu.vector_store %arg10[%c0_6, %c0_7], %7 {strides = array<i32>} : memref<8x128xf32, #tpu.memory_space<vmem>>, vector<8x128xf32>,
    %c0_i32_8 = arith.constant 0 : i32
    %9 = arith.cmpi eq, %arg2, %c0_i32_8 : i32
    %10 = arith.extui %9 : i1 to i32
    %c0_i32_9 = arith.constant 0 : i32
    %11 = arith.cmpi ne, %10, %c0_i32_9 : i32
    scf.if %11 {
      %c0_10 = arith.constant 0 : index
      %12 = memref.load %arg3[%c0_10] : memref<5xf32, #tpu.memory_space<smem>>
      %c1 = arith.constant 1 : index
      %13 = memref.load %arg3[%c1] : memref<5xf32, #tpu.memory_space<smem>>
      %c2 = arith.constant 2 : index
      %14 = memref.load %arg3[%c2] : memref<5xf32, #tpu.memory_space<smem>>
      %c3 = arith.constant 3 : index
      %15 = memref.load %arg3[%c3] : memref<5xf32, #tpu.memory_space<smem>>
      %c4 = arith.constant 4 : index
      %16 = memref.load %arg3[%c4] : memref<5xf32, #tpu.memory_space<smem>>
      %c0_11 = arith.constant 0 : index
      %c0_12 = arith.constant 0 : index
      %17 = vector.load %arg10[%c0_11, %c0_12] : memref<8x128xf32, #tpu.memory_space<vmem>>, vector<8x128xf32>
      %c0_13 = arith.constant 0 : index
      %c0_14 = arith.constant 0 : index
      %18 = vector.load %arg6[%c0_13, %c0_14] : memref<8x1xf32, #tpu.memory_space<vmem>>, vector<8x1xf32>
      %19 = vector.broadcast %18 : vector<8x1xf32> to vector<8x128xf32>
      %20 = arith.mulf %17, %19 : vector<8x128xf32>
      %c0_15 = arith.constant 0 : index
      %c0_16 = arith.constant 0 : index
      %21 = vector.load %arg7[%c0_15, %c0_16] : memref<1x128xf32, #tpu.memory_space<vmem>>, vector<1x128xf32>
      %22 = vector.broadcast %21 : vector<1x128xf32> to vector<8x128xf32>
      %23 = arith.mulf %20, %22 : vector<8x128xf32>
      %c0_17 = arith.constant 0 : index
      %c0_18 = arith.constant 0 : index
      %24 = vector.load %arg9[%c0_17, %c0_18] : memref<8x128xf32, #tpu.memory_space<vmem>>, vector<8x128xf32>
      tpu.vector_store %arg9[%c0_17, %c0_18], %23 {strides = array<i32>} : memref<8x128xf32, #tpu.memory_space<vmem>>, vector<8x128xf32>,
      %25 = arith.mulf %23, %23 : vector<8x128xf32>
      %cst_19 = arith.constant 1.000000e+00 : f32
      %26 = vector.broadcast %cst_19 : f32 to vector<8x128xf32>
      %27 = arith.subf %26, %25 : vector<8x128xf32>
      %cst_20 = arith.constant 0.000000e+00 : f32
      %cst_21 = arith.constant 1.000000e+00 : f32
      %28 = vector.broadcast %cst_20 : f32 to vector<8x128xf32>
      %29 = arith.maximumf %28, %27 : vector<8x128xf32>
      %30 = vector.broadcast %cst_21 : f32 to vector<8x128xf32>
      %31 = arith.minimumf %30, %29 : vector<8x128xf32>
      %32 = math.sqrt %31 : vector<8x128xf32>
      %33 = vector.broadcast %12 : f32 to vector<8x128xf32>
      %34 = arith.mulf %23, %33 : vector<8x128xf32>
      %35 = vector.broadcast %13 : f32 to vector<8x128xf32>
      %36 = arith.mulf %32, %35 : vector<8x128xf32>
      %37 = arith.subf %34, %36 : vector<8x128xf32>
      %38 = vector.broadcast %14 : f32 to vector<8x128xf32>
      %39 = arith.cmpf ogt, %23, %38 : vector<8x128xf32>
      %40 = vector.broadcast %15 : f32 to vector<8x128xf32>
      %41 = arith.subf %23, %40 : vector<8x128xf32>
      %42 = arith.select %39, %37, %41 : vector<8x128xi1>, vector<8x128xf32>
      %43 = vector.broadcast %16 : f32 to vector<8x128xf32>
      %44 = arith.mulf %42, %43 : vector<8x128xf32>
      %c0_22 = arith.constant 0 : index
      %c0_23 = arith.constant 0 : index
      %45 = vector.load %arg8[%c0_22, %c0_23] : memref<8x128xf32, #tpu.memory_space<vmem>>, vector<8x128xf32>
      tpu.vector_store %arg8[%c0_22, %c0_23], %44 {strides = array<i32>} : memref<8x128xf32, #tpu.memory_space<vmem>>, vector<8x128xf32>,
    } else {
    }
    return
  }
  func.func @transform_0(%arg0: i32, %arg1: i32, %arg2: i32) -> i32 {
    %c0_i32 = arith.constant 0 : i32
    %c0_i32_0 = arith.constant 0 : i32
    return %c0_i32 : i32
  }
  func.func @transform_1(%arg0: i32, %arg1: i32, %arg2: i32) -> (i32, i32) {
    %c0_i32 = arith.constant 0 : i32
    return %arg0, %arg2 : i32, i32
  }
  func.func @transform_2(%arg0: i32, %arg1: i32, %arg2: i32) -> (i32, i32) {
    %c0_i32 = arith.constant 0 : i32
    return %arg1, %arg2 : i32, i32
  }
  func.func @transform_3(%arg0: i32, %arg1: i32, %arg2: i32) -> (i32, i32) {
    %c0_i32 = arith.constant 0 : i32
    %c0_i32_0 = arith.constant 0 : i32
    return %arg0, %c0_i32 : i32, i32
  }
  func.func @transform_4(%arg0: i32, %arg1: i32, %arg2: i32) -> (i32, i32) {
    %c0_i32 = arith.constant 0 : i32
    %c0_i32_0 = arith.constant 0 : i32
    return %c0_i32, %arg1 : i32, i32
  }
  func.func @transform_5(%arg0: i32, %arg1: i32, %arg2: i32) -> (i32, i32) {
    %c0_i32 = arith.constant 0 : i32
    return %arg0, %arg1 : i32, i32
  }
  func.func @transform_6(%arg0: i32, %arg1: i32, %arg2: i32) -> (i32, i32) {
    %c0_i32 = arith.constant 0 : i32
    return %arg0, %arg1 : i32, i32
  }
}

</mosaic_0001>

<llo_original>
// kernel: tpu_custom_call.1
$region0: #{tpu_custom_call.1}
  #allocation0 [shape = 'u32[]', space=smem, size = 0x4, offset = 0x4, fixed_abs, tag = 'smem constant byte address 0x4 - core index']
  #allocation1 [shape = 'u32[72,128]{1,0:T(1,128)}', space=vmem, size = 0x9000, scoped, tag = 'internal scratch']
  #allocation2 [shape = 'f32[8,128]{1,0:T(8,128)}', space=vmem, size = 0x1000, scoped, tag = 'scratch operand']
  %s0 = inlined_call_operand.vmem [shape: f32[5], index: 0, kind: input, shape index: {}]
  %s1 = inlined_call_operand.vmem [shape: f32[8,128], index: 1, kind: input, shape index: {}]
  %s2 = inlined_call_operand.hbm [shape: f32[128,128], index: 2, kind: input, shape index: {}]
  %s3 = inlined_call_operand.vmem [shape: f32[8,1], index: 3, kind: input, shape index: {}]
  %s4 = inlined_call_operand.vmem [shape: f32[1,128], index: 4, kind: input, shape index: {}]
  %s5 = inlined_call_operand.hbm [shape: f32[8,128], index: 5, kind: output, shape index: {0}]
  %s6 = inlined_call_operand.hbm [shape: f32[8,128], index: 6, kind: output, shape index: {1}]
  %7 = xla_tuple %s5, %s6
  %s8 = sld [smem:[#allocation0]]
  $region54: #{tpu_custom_call.1} parent=0
    _
  %s10 = ssub.s32 1, %s8
  %s11 = scalar_select 0, %s10, %s8
  $region1: #{tpu_custom_call.1} parent=0
    #allocation3 [shape = 'u8[512]{0}', space=smem, size = 0x200, scoped, tag = 'input window, operand 0, single buffered']
    #allocation4 [shape = 's32[1]{0}', space=sflag, size = 0x4, scoped, tag = 'scoped memory for tpu_custom_call.1']
    #allocation5 [shape = 's32[1]{0}', space=sflag, size = 0x4, scoped, tag = 'scoped memory for tpu_custom_call.1']
    #allocation6 [shape = 's32[1]{0}', space=sflag, size = 0x4, scoped, tag = 'scoped memory for tpu_custom_call.1']
    #allocation7 [shape = 'u8[65536]{0}', space=vmem, size = 0x10000, scoped, tag = 'input window, operand 2, single buffered']
    #allocation8 [shape = 'u8[4096]{0}', space=vmem, size = 0x1000, scoped, tag = 'output window, operand 0, single buffered']
    #allocation9 [shape = 'u8[4096]{0}', space=vmem, size = 0x1000, scoped, tag = 'output window, operand 1, single buffered']
    #allocation10 [shape = 's32[1]{0}', space=sflag, size = 0x4, scoped, tag = 'scoped memory for tpu_custom_call.1']
    %12 = vsyncpa [#allocation6], 0
    %13 = vsyncpa [#allocation4], 0
    %14 = vsyncpa [#allocation5], 0
    %15 = vsyncpa [#allocation10], 0
    // Predicated region
    $region2: #{tpu_custom_call.1} parent=1 // pred_check
      _
    $region3: #{tpu_custom_call.1} parent=1 // pred_check_branch
      %17 = sbr.rel (0) target = $region5
    $region4: #{tpu_custom_call.1} parent=1 // pred_region
      %19 = vsyncadd [#allocation6], 0
      %s21 = sshll.u32 %s0, 4
      %s22 = int_to_ptr.vmem [resolvable:$true] %s21
      %24 = dma.vmem_to_smem %s22, 16, [#allocation3], [#allocation6]
    $region5: #{tpu_custom_call.1} parent=1 // pred_fallthru
      _
    // Predicated region
    $region6: #{tpu_custom_call.1} parent=1 // pred_check
      _
    $region7: #{tpu_custom_call.1} parent=1 // pred_check_branch
      %26 = sbr.rel (0) target = $region9
    $region8: #{tpu_custom_call.1} parent=1 // pred_region
      _
    $region9: #{tpu_custom_call.1} parent=1 // pred_fallthru
      _
    // Predicated region
    $region10: #{tpu_custom_call.1} parent=1 // pred_check
      _
    $region11: #{tpu_custom_call.1} parent=1 // pred_check_branch
      %28 = sbr.rel (0) target = $region13
    $region12: #{tpu_custom_call.1} parent=1 // pred_region
      %30 = vsyncadd [#allocation4], 0
      %s31 = sshll.u32 %s2, 4
      %s32 = int_to_ptr.hbm [resolvable:$true] %s31
      %s33 = sshll.u32 [#allocation7], 4
      %s34 = int_to_ptr.vmem [resolvable:$true] %s33
      %39 = dma.hbm_to_vmem [thread:$0]  %s32, 2048, %s34, [#allocation4], 128, 128, 8
    $region13: #{tpu_custom_call.1} parent=1 // pred_fallthru
      _
    // Predicated region
    $region14: #{tpu_custom_call.1} parent=1 // pred_check
      _
    $region15: #{tpu_custom_call.1} parent=1 // pred_check_branch
      %41 = sbr.rel (0) target = $region17
    $region16: #{tpu_custom_call.1} parent=1 // pred_region
      _
    $region17: #{tpu_custom_call.1} parent=1 // pred_fallthru
      _
    // Predicated region
    $region18: #{tpu_custom_call.1} parent=1 // pred_check
      _
    $region19: #{tpu_custom_call.1} parent=1 // pred_check_branch
      %43 = sbr.rel (0) target = $region21
    $region20: #{tpu_custom_call.1} parent=1 // pred_region
      _
    $region21: #{tpu_custom_call.1} parent=1 // pred_fallthru
      _
    // Predicated region
    $region22: #{tpu_custom_call.1} parent=1 // pred_check
      _
    $region23: #{tpu_custom_call.1} parent=1 // pred_check_branch
      %45 = sbr.rel (0) target = $region25
    $region24: #{tpu_custom_call.1} parent=1 // pred_region
      %47 = dma.done [#allocation6], 16
    $region25: #{tpu_custom_call.1} parent=1 // pred_fallthru
      _
    // Predicated region
    $region26: #{tpu_custom_call.1} parent=1 // pred_check
      _
    $region27: #{tpu_custom_call.1} parent=1 // pred_check_branch
      %49 = sbr.rel (0) target = $region29
    $region28: #{tpu_custom_call.1} parent=1 // pred_region
      %51 = dma.done [#allocation4], 2048
    $region29: #{tpu_custom_call.1} parent=1 // pred_fallthru
      _
    %52 = sfence
    %p53 = scmp.eq.s32.totalorder 0, 0
    // Predicated region
    $region30: #{tpu_custom_call.1} parent=1 // pred_check
      %p54 = pneg %p53
    $region31: #{tpu_custom_call.1} parent=1 // pred_check_branch
      %56 = sbr.rel (%p54) target = $region33
    $region32: #{tpu_custom_call.1} parent=1 // pred_region
      %57 = vst [vmem:[#allocation2] sm:$0xff] 0.0
    $region33: #{tpu_custom_call.1} parent=1 // pred_fallthru
      _
    %v58 = vld [vmem:[#allocation2] sm:$0xff]
    %v59 = vld [vmem:[%s1] sm:$0xff]
    %v60 = vld [vmem:[#allocation7] sm:$0xff]
    %v61 = vld [vmem:[#allocation7 + $0x8] sm:$0xff]
    %v62 = vld [vmem:[#allocation7 + $0x10] sm:$0xff]
    %v63 = vld [vmem:[#allocation7 + $0x18] sm:$0xff]
    %v64 = vld [vmem:[#allocation7 + $0x20] sm:$0xff]
    %v65 = vld [vmem:[#allocation7 + $0x28] sm:$0xff]
    %v66 = vld [vmem:[#allocation7 + $0x30] sm:$0xff]
    %v67 = vld [vmem:[#allocation7 + $0x38] sm:$0xff]
    %v68 = vld [vmem:[#allocation7 + $0x40] sm:$0xff]
    %v69 = vld [vmem:[#allocation7 + $0x48] sm:$0xff]
    %v70 = vld [vmem:[#allocation7 + $0x50] sm:$0xff]
    %v71 = vld [vmem:[#allocation7 + $0x58] sm:$0xff]
    %v72 = vld [vmem:[#allocation7 + $0x60] sm:$0xff]
    %v73 = vld [vmem:[#allocation7 + $0x68] sm:$0xff]
    %v74 = vld [vmem:[#allocation7 + $0x70] sm:$0xff]
    %v75 = vld [vmem:[#allocation7 + $0x78] sm:$0xff]
    %76 = vmatpush.xpose.msra.mxu0 %v75
    %77 = vmatpush.xpose.msra.mxu0 %v74
    %78 = vmatpush.xpose.msra.mxu0 %v73
    %79 = vmatpush.xpose.msra.mxu0 %v72
    %80 = vmatpush.xpose.msra.mxu0 %v71
    %81 = vmatpush.xpose.msra.mxu0 %v70
    %82 = vmatpush.xpose.msra.mxu0 %v69
    %83 = vmatpush.xpose.msra.mxu0 %v68
    %84 = vmatpush.xpose.msra.mxu0 %v67
    %85 = vmatpush.xpose.msra.mxu0 %v66
    %86 = vmatpush.xpose.msra.mxu0 %v65
    %87 = vmatpush.xpose.msra.mxu0 %v64
    %88 = vmatpush.xpose.msra.mxu0 %v63
    %89 = vmatpush.xpose.msra.mxu0 %v62
    %90 = vmatpush.xpose.msra.mxu0 %v61
    %91 = vmatpush.xpose.msra.mxu0 %v60
    %92 = vmatmul.f32.gmra.mxu0 %v59
    %v93 = vpop.f32.mrf.mxu0
    %v94 = vadd.f32 0.0, %v93
    %95 = vdwg.mxu0
    %v96 = vadd.f32 %v58, %v94
    %97 = vst [vmem:[#allocation2] sm:$0xff] %v96
    // Predicated region
    $region34: #{tpu_custom_call.1} parent=1 // pred_check
      %p98 = pneg %p53
    $region35: #{tpu_custom_call.1} parent=1 // pred_check_branch
      %100 = sbr.rel (%p98) target = $region37
    $region36: #{tpu_custom_call.1} parent=1 // pred_region
      %s101 = sld [smem:[#allocation3]]
      %s102 = sld [smem:[#allocation3 + $0x1]]
      %s103 = sld [smem:[#allocation3 + $0x2]]
      %s104 = sld [smem:[#allocation3 + $0x3]]
      %s105 = sld [smem:[#allocation3 + $0x4]]
      %v106 = vld [vmem:[#allocation2] sm:$0xff]
      %v107 = vld [vmem:[%s3] sm:$0xff]
      %109 = vset.pattern.permute.xlu0 0
      %110 = vperm.xlu0 %109, %v107
      %v111 = vpop.permute.xlu0 %110
      %v113 = vmul.f32 %v106, %v111
      %v114 = vld [vmem:[%s4] sm:$0x1]
      %v116 = vperm.slane %v114, 0
      %v118 = vmul.f32 %v113, %v116
      %119 = vst [vmem:[#allocation9] sm:$0xff] %v118
      %v120 = vmul.f32 %v118, %v118
      %v121 = vsub.f32 1.0, %v120
      %v122 = vmax.f32 %v121, 0.0
      %v123 = vmin.f32 %v122, 1.0
      %v124 = vrsqrt.pop %v123
      %v125 = vmul.f32 %v124, %v123
      %v126 = vmul.f32 %v125, %v124
      %v127 = vmul.f32 0.5, %v126
      %v128 = vsub.f32 1.5, %v127
      %v129 = vmul.f32 %v124, %v128
      %v130 = vmul.f32 %v123, %v129
      %vm131 = vcmp.eq.f32.partialorder %v123, inf
      %v132 = vsel %vm131, %v123, %v130
      %vm133 = vcmp.eq.f32.partialorder %v123, 0.0
      %v134 = vand.u32 %v123, 2147483648
      %v135 = vsel %vm133, %v134, %v132
      %v136 = vstv %s101
      %v137 = vmul.f32 %v118, %v136
      %v138 = vstv %s102
      %v139 = vmul.f32 %v135, %v138
      %v140 = vsub.f32 %v137, %v139
      %v141 = vstv %s103
      %vm142 = vcmp.gt.f32.partialorder %v118, %v141
      %v143 = vstv %s104
      %v144 = vsub.f32 %v118, %v143
      %v145 = vsel %vm142, %v140, %v144
      %v146 = vstv %s105
      %v147 = vmul.f32 %v145, %v146
      %148 = vst [vmem:[#allocation8] sm:$0xff] %v147
    $region37: #{tpu_custom_call.1} parent=1 // pred_fallthru
      _
    // Predicated region
    $region38: #{tpu_custom_call.1} parent=1 // pred_check
      _
    $region39: #{tpu_custom_call.1} parent=1 // pred_check_branch
      %150 = sbr.rel (0) target = $region41
    $region40: #{tpu_custom_call.1} parent=1 // pred_region
      %152 = vsyncadd [#allocation5], 0
      %s154 = sshll.u32 [#allocation8], 4
      %s155 = int_to_ptr.vmem [resolvable:$true] %s154
      %s156 = sshll.u32 %s5, 4
      %s157 = int_to_ptr.hbm [resolvable:$true] %s156
      %159 = dma.vmem_to_hbm [thread:$0]  %s155, 128, %s157, [#allocation5]
    $region41: #{tpu_custom_call.1} parent=1 // pred_fallthru
      _
    // Predicated region
    $region42: #{tpu_custom_call.1} parent=1 // pred_check
      _
    $region43: #{tpu_custom_call.1} parent=1 // pred_check_branch
      %161 = sbr.rel (0) target = $region45
    $region44: #{tpu_custom_call.1} parent=1 // pred_region
      %163 = vsyncadd [#allocation10], 0
      %s165 = sshll.u32 [#allocation9], 4
      %s166 = int_to_ptr.vmem [resolvable:$true] %s165
      %s167 = sshll.u32 %s6, 4
      %s168 = int_to_ptr.hbm [resolvable:$true] %s167
      %170 = dma.vmem_to_hbm [thread:$0]  %s166, 128, %s168, [#allocation10]
    $region45: #{tpu_custom_call.1} parent=1 // pred_fallthru
      _
    // Predicated region
    $region46: #{tpu_custom_call.1} parent=1 // pred_check
      _
    $region47: #{tpu_custom_call.1} parent=1 // pred_check_branch
      %172 = sbr.rel (0) target = $region49
    $region48: #{tpu_custom_call.1} parent=1 // pred_region
      %174 = dma.done [#allocation5], 128
    $region49: #{tpu_custom_call.1} parent=1 // pred_fallthru
      _
    // Predicated region
    $region50: #{tpu_custom_call.1} parent=1 // pred_check
      _
    $region51: #{tpu_custom_call.1} parent=1 // pred_check_branch
      %176 = sbr.rel (0) target = $region53
    $region52: #{tpu_custom_call.1} parent=1 // pred_region
      %178 = dma.done [#allocation10], 128
    $region53: #{tpu_custom_call.1} parent=1 // pred_fallthru
      _
    %179 = vsyncpa [#allocation4], 1
    %180 = vsyncpa [#allocation5], 1
    %181 = vsyncpa [#allocation10], 1
    %182 = vsyncpa [#allocation6], 1

</llo_original>
